<compile_context>
chip_gen: v7x
topology: tpu7x:2x2x1
jax: 0.10.0
libtpu: 0.0.40
codegen_flags: <defaults>
</compile_context>

<pallas_src>
import functools

import jax
import jax.numpy as jnp
from jax.experimental import pallas as pl
from jax.experimental.pallas import tpu as pltpu

# Logical (PyTorch) dims.
IN_DIM = 291
HID_DIM = 160
OUT_DIM = 6

# Lane-aligned (padded) dims for the matmul N axes / output store.
HID_PAD = 256   # 160 -> 2*128
OUT_PAD = 128   # 6   -> 1*128

_NEG_LARGE = -1e30  # baked into the padded b2 columns (wrapper side only)


def _cdiv(a, b):
    return -(-a // b)


def _round_up(n, m):
    return ((n + m - 1) // m) * m


def reinforce_net3_kernel(x_ref, w1_ref, b1_ref, w2_ref, b2_ref, o_ref):
    # x arrives as f32 (tb, 291); cast to bf16 for the MXU (VPU has slack).
    x = x_ref[...].astype(jnp.bfloat16)

    # fc1: (tb, 291) bf16 @ (291, 256) bf16 -> f32 accumulate on the MXU.
    h = jnp.dot(x, w1_ref[...], preferred_element_type=jnp.float32)
    h = jnp.maximum(h + b1_ref[...], 0.0)  # bias + ReLU in f32 (VPU)

    # fc2: (tb, 256) bf16 @ (256, 128) bf16 -> f32.  b2 is padded with -1e30
    # in columns >= OUT_DIM, which doubles as the softmax column mask.
    logits = jnp.dot(h.astype(jnp.bfloat16), w2_ref[...],
                     preferred_element_type=jnp.float32) + b2_ref[...]

    # Softmax over the lane axis, all f32; exact divide (cost hidden, HBM-bound).
    m = jnp.max(logits, axis=1, keepdims=True)
    e = jnp.exp(logits - m)
    denom = jnp.sum(e, axis=1, keepdims=True)
    o_ref[...] = (e / denom).astype(o_ref.dtype)


@functools.partial(jax.jit, static_argnames=("block_b",))
def reinforce_net3_forward(x, w1, b1, w2, b2, block_b=4096):
    """x: (B, 291) f32; w1: (291, 160); b1: (1, 160); w2: (160, 6); b2: (1, 6).

    Weights are stored as (in, out) so the kernel computes x @ W + b
    (equivalent to PyTorch's y = x @ W.T + b).
    """
    B = x.shape[0]

    # Batch tile: aim for >= 4 grid steps (megacore sharding on v7x needs >= 2),
    # 16-row granularity (bf16 output sublane packing), capped at block_b.
    tb = min(block_b, _round_up(max(1, _cdiv(B, 4)), 16))
    if tb >= B:
        tb = B  # single block covering the whole batch (full-dim block is legal)
    grid = _cdiv(B, tb)  # trailing partial block is fine (rows are independent)

    # Only the small weight/bias tensors are padded (one-time, tiny); x is fed
    # unpadded so it crosses HBM exactly once.
    w1_p = jnp.pad(w1.astype(jnp.bfloat16), ((0, 0), (0, HID_PAD - HID_DIM)))
    b1_p = jnp.pad(b1.astype(jnp.float32), ((0, 0), (0, HID_PAD - HID_DIM)))
    w2_p = jnp.pad(w2.astype(jnp.bfloat16),
                   ((0, HID_PAD - HID_DIM), (0, OUT_PAD - OUT_DIM)))
    # -1e30 in the padded bias columns masks those logits before the softmax.
    b2_p = jnp.pad(b2.astype(jnp.float32), ((0, 0), (0, OUT_PAD - OUT_DIM)),
                   constant_values=_NEG_LARGE)

    out = pl.pallas_call(
        reinforce_net3_kernel,
        out_shape=jax.ShapeDtypeStruct((B, OUT_PAD), jnp.bfloat16),
        grid_spec=pltpu.PrefetchScalarGridSpec(
            num_scalar_prefetch=0,
            grid=(grid,),
            in_specs=[
                pl.BlockSpec((tb, IN_DIM), lambda i: (i, 0)),          # x: streamed
                pl.BlockSpec((IN_DIM, HID_PAD), lambda i: (0, 0)),     # w1: resident
                pl.BlockSpec((1, HID_PAD), lambda i: (0, 0)),          # b1: resident
                pl.BlockSpec((HID_PAD, OUT_PAD), lambda i: (0, 0)),    # w2: resident
                pl.BlockSpec((1, OUT_PAD), lambda i: (0, 0)),          # b2: resident
            ],
            out_specs=pl.BlockSpec((tb, OUT_PAD), lambda i: (i, 0)),
        ),
        compiler_params=pltpu.CompilerParams(
            dimension_semantics=("parallel",),
            vmem_limit_bytes=48 * 1024 * 1024,
        ),
        # NOTE: a pipeline_mode=pl.Buffered(...) sweep on the resident specs /
        # the x stream is a possible 0-5% follow-up; not baked in.
    )(x, w1_p, b1_p, w2_p, b2_p)

    return out[:, :OUT_DIM].astype(jnp.float32)


def init_params(key):
    """Deterministic init mimicking nn.Linear default (uniform +/- 1/sqrt(fan_in))."""
    k1, k2, k3, k4 = jax.random.split(key, 4)
    bound1 = 1.0 / jnp.sqrt(jnp.float32(IN_DIM))
    bound2 = 1.0 / jnp.sqrt(jnp.float32(HID_DIM))
    # stored as (in, out): equivalent to torch weight.T
    w1 = jax.random.uniform(k1, (IN_DIM, HID_DIM), jnp.float32, -bound1, bound1)
    b1 = jax.random.uniform(k2, (1, HID_DIM), jnp.float32, -bound1, bound1)
    w2 = jax.random.uniform(k3, (HID_DIM, OUT_DIM), jnp.float32, -bound2, bound2)
    b2 = jax.random.uniform(k4, (1, OUT_DIM), jnp.float32, -bound2, bound2)
    return w1, b1, w2, b2


def reference_forward(x, w1, b1, w2, b2):
    h = jnp.maximum(x @ w1 + b1, 0.0)
    logits = h @ w2 + b2
    return jax.nn.softmax(logits, axis=1)


# TODO(synk): update_weights / eligibility traces / select_action are host-side
# training-loop logic (autograd + Python RNG), not part of the forward pass.

if __name__ == "__main__":
    key = jax.random.PRNGKey(0)
    kx, kp = jax.random.split(key)
    batch = 4
    x = jax.random.normal(kx, (batch, IN_DIM), jnp.float32)
    w1, b1, w2, b2 = init_params(kp)

    out = reinforce_net3_forward(x, w1, b1, w2, b2)
    out = jax.block_until_ready(out)

    ref = reference_forward(x, w1, b1, w2, b2)
    assert out.shape == (batch, OUT_DIM)
    # bf16 matmul operands + bf16 output store -> compare loosely to f32 reference.
    assert jnp.allclose(out, ref, atol=2e-2, rtol=2e-2)
    # rows of the softmax sum to ~1 (bf16 output rounding tolerance)
    assert jnp.allclose(jnp.sum(out, axis=1), jnp.ones((batch,)), atol=1e-2)

    print("KERNEL_OK")
</pallas_src>

<mosaic_0001>
module attributes {stable_mosaic.version = 11 : i64} {
  func.func @reinforce_net3_kernel(%arg0: i32, %arg1: memref<4x291xf32, #tpu.memory_space<vmem>>, %arg2: memref<291x256xbf16, #tpu.memory_space<vmem>>, %arg3: memref<1x256xf32, #tpu.memory_space<vmem>>, %arg4: memref<256x128xbf16, #tpu.memory_space<vmem>>, %arg5: memref<1x128xf32, #tpu.memory_space<vmem>>, %arg6: memref<4x128xbf16, #tpu.memory_space<vmem>>) attributes {dimension_semantics = [#tpu.dimension_semantics<parallel>], iteration_bounds = array<i64: 1>, scalar_prefetch = 0 : i64, scratch_operands = 0 : i64, tpu.core_type = #tpu.core_type<tc>, window_params = [{transform_indices = @transform_0, window_bounds = array<i64: 4, 291>}, {pipeline_mode = #tpu.pipeline_mode<synchronous>, transform_indices = @transform_1, window_bounds = array<i64: 291, 256>}, {pipeline_mode = #tpu.pipeline_mode<synchronous>, transform_indices = @transform_2, window_bounds = array<i64: 1, 256>}, {pipeline_mode = #tpu.pipeline_mode<synchronous>, transform_indices = @transform_3, window_bounds = array<i64: 256, 128>}, {pipeline_mode = #tpu.pipeline_mode<synchronous>, transform_indices = @transform_4, window_bounds = array<i64: 1, 128>}, {transform_indices = @transform_5, window_bounds = array<i64: 4, 128>}]} {
    %c0 = arith.constant 0 : index
    %c0_0 = arith.constant 0 : index
    %0 = vector.load %arg1[%c0, %c0_0] : memref<4x291xf32, #tpu.memory_space<vmem>>, vector<4x291xf32>
    %1 = arith.truncf %0 : vector<4x291xf32> to vector<4x291xbf16>
    %c0_1 = arith.constant 0 : index
    %c0_2 = arith.constant 0 : index
    %2 = vector.load %arg2[%c0_1, %c0_2] : memref<291x256xbf16, #tpu.memory_space<vmem>>, vector<291x256xbf16>
    %cst = arith.constant dense<0.000000e+00> : vector<4x256xf32>
    %3 = tpu.matmul %1, %2, %cst {dimension_numbers = #tpu.dot_dimension_numbers<[1], [0], [0], [1], [0, 0, 1, 1], [], []>} : vector<4x291xbf16>, vector<291x256xbf16>, vector<4x256xf32> -> vector<4x256xf32>
    %c0_3 = arith.constant 0 : index
    %c0_4 = arith.constant 0 : index
    %4 = vector.load %arg3[%c0_3, %c0_4] : memref<1x256xf32, #tpu.memory_space<vmem>>, vector<1x256xf32>
    %5 = vector.broadcast %4 : vector<1x256xf32> to vector<4x256xf32>
    %6 = arith.addf %3, %5 : vector<4x256xf32>
    %cst_5 = arith.constant 0.000000e+00 : f32
    %7 = vector.broadcast %cst_5 : f32 to vector<4x256xf32>
    %8 = arith.maximumf %6, %7 : vector<4x256xf32>
    %9 = arith.truncf %8 : vector<4x256xf32> to vector<4x256xbf16>
    %c0_6 = arith.constant 0 : index
    %c0_7 = arith.constant 0 : index
    %10 = vector.load %arg4[%c0_6, %c0_7] : memref<256x128xbf16, #tpu.memory_space<vmem>>, vector<256x128xbf16>
    %cst_8 = arith.constant dense<0.000000e+00> : vector<4x128xf32>
    %11 = tpu.matmul %9, %10, %cst_8 {dimension_numbers = #tpu.dot_dimension_numbers<[1], [0], [0], [1], [0, 0, 1, 1], [], []>} : vector<4x256xbf16>, vector<256x128xbf16>, vector<4x128xf32> -> vector<4x128xf32>
    %c0_9 = arith.constant 0 : index
    %c0_10 = arith.constant 0 : index
    %12 = vector.load %arg5[%c0_9, %c0_10] : memref<1x128xf32, #tpu.memory_space<vmem>>, vector<1x128xf32>
    %13 = vector.broadcast %12 : vector<1x128xf32> to vector<4x128xf32>
    %14 = arith.addf %11, %13 : vector<4x128xf32>
    %cst_11 = arith.constant dense<0xFF800000> : vector<4xf32>
    %15 = vector.multi_reduction <maximumf>, %14, %cst_11 [1] : vector<4x128xf32> to vector<4xf32>
    %16 = vector.shape_cast %15 : vector<4xf32> to vector<4x1xf32>
    %17 = vector.broadcast %16 : vector<4x1xf32> to vector<4x128xf32>
    %18 = arith.subf %14, %17 : vector<4x128xf32>
    %19 = math.exp %18 : vector<4x128xf32>
    %cst_12 = arith.constant dense<0.000000e+00> : vector<4xf32>
    %20 = vector.multi_reduction <add>, %19, %cst_12 [1] : vector<4x128xf32> to vector<4xf32>
    %21 = vector.shape_cast %20 : vector<4xf32> to vector<4x1xf32>
    %22 = vector.broadcast %21 : vector<4x1xf32> to vector<4x128xf32>
    %23 = arith.divf %19, %22 : vector<4x128xf32>
    %24 = arith.truncf %23 : vector<4x128xf32> to vector<4x128xbf16>
    %c0_13 = arith.constant 0 : index
    %c0_14 = arith.constant 0 : index
    %25 = vector.load %arg6[%c0_13, %c0_14] : memref<4x128xbf16, #tpu.memory_space<vmem>>, vector<4x128xbf16>
    tpu.vector_store %arg6[%c0_13, %c0_14], %24 {strides = array<i32>} : memref<4x128xbf16, #tpu.memory_space<vmem>>, vector<4x128xbf16>,
    return
  }
  func.func @transform_0(%arg0: i32) -> (i32, i32) {
    %c0_i32 = arith.constant 0 : i32
    %c0_i32_0 = arith.constant 0 : i32
    return %arg0, %c0_i32 : i32, i32
  }
  func.func @transform_1(%arg0: i32) -> (i32, i32) {
    %c0_i32 = arith.constant 0 : i32
    %c0_i32_0 = arith.constant 0 : i32
    %c0_i32_1 = arith.constant 0 : i32
    return %c0_i32, %c0_i32_0 : i32, i32
  }
  func.func @transform_2(%arg0: i32) -> (i32, i32) {
    %c0_i32 = arith.constant 0 : i32
    %c0_i32_0 = arith.constant 0 : i32
    %c0_i32_1 = arith.constant 0 : i32
    return %c0_i32, %c0_i32_0 : i32, i32
  }
  func.func @transform_3(%arg0: i32) -> (i32, i32) {
    %c0_i32 = arith.constant 0 : i32
    %c0_i32_0 = arith.constant 0 : i32
    %c0_i32_1 = arith.constant 0 : i32
    return %c0_i32, %c0_i32_0 : i32, i32
  }
  func.func @transform_4(%arg0: i32) -> (i32, i32) {
    %c0_i32 = arith.constant 0 : i32
    %c0_i32_0 = arith.constant 0 : i32
    %c0_i32_1 = arith.constant 0 : i32
    return %c0_i32, %c0_i32_0 : i32, i32
  }
  func.func @transform_5(%arg0: i32) -> (i32, i32) {
    %c0_i32 = arith.constant 0 : i32
    %c0_i32_0 = arith.constant 0 : i32
    return %arg0, %c0_i32 : i32, i32
  }
}

</mosaic_0001>

<llo_original>
// kernel: reinforce_net3_forward.1
$region0: #{reinforce_net3_forward.1}
  #allocation0 [shape = 'u32[]', space=smem, size = 0x4, offset = 0x4, fixed_abs, tag = 'smem constant byte address 0x4 - core index']
  #allocation1 [shape = 'u32[144,128]{1,0:T(1,128)}', space=vmem, size = 0x12000, scoped, tag = 'internal scratch']
  %s0 = inlined_call_operand.vmem [shape: f32[4,291], index: 0, kind: input, shape index: {}]
  %s1 = inlined_call_operand.vmem [shape: bf16[291,256], index: 1, kind: input, shape index: {}]
  %s2 = inlined_call_operand.vmem [shape: f32[1,256], index: 2, kind: input, shape index: {}]
  %s3 = inlined_call_operand.vmem [shape: bf16[256,128], index: 3, kind: input, shape index: {}]
  %s4 = inlined_call_operand.vmem [shape: f32[1,128], index: 4, kind: input, shape index: {}]
  %s5 = inlined_call_operand.vmem [shape: bf16[4,128], index: 5, kind: output, shape index: {}]
  %s6 = sld [smem:[#allocation0]]
  $region30: #{reinforce_net3_forward.1} parent=0
    _
  %s8 = ssub.s32 1, %s6
  %s9 = scalar_select 0, %s8, %s6
  // Predicated region
  $region2: #{reinforce_net3_forward.1} parent=0 // pred_check
    _
  $region3: #{reinforce_net3_forward.1} parent=0 // pred_check_branch
    %11 = sbr.rel (0) target = $region5
  $region4: #{reinforce_net3_forward.1} parent=0 // pred_region
    _
  $region5: #{reinforce_net3_forward.1} parent=0 // pred_fallthru
    _
  // Predicated region
  $region6: #{reinforce_net3_forward.1} parent=0 // pred_check
    _
  $region7: #{reinforce_net3_forward.1} parent=0 // pred_check_branch
    %13 = sbr.rel (0) target = $region9
  $region8: #{reinforce_net3_forward.1} parent=0 // pred_region
    _
  $region9: #{reinforce_net3_forward.1} parent=0 // pred_fallthru
    _
  // Predicated region
  $region10: #{reinforce_net3_forward.1} parent=0 // pred_check
    _
  $region11: #{reinforce_net3_forward.1} parent=0 // pred_check_branch
    %15 = sbr.rel (0) target = $region13
  $region12: #{reinforce_net3_forward.1} parent=0 // pred_region
    _
  $region13: #{reinforce_net3_forward.1} parent=0 // pred_fallthru
    _
  // Predicated region
  $region14: #{reinforce_net3_forward.1} parent=0 // pred_check
    _
  $region15: #{reinforce_net3_forward.1} parent=0 // pred_check_branch
    %17 = sbr.rel (0) target = $region17
  $region16: #{reinforce_net3_forward.1} parent=0 // pred_region
    _
  $region17: #{reinforce_net3_forward.1} parent=0 // pred_fallthru
    _
  // Predicated region
  $region18: #{reinforce_net3_forward.1} parent=0 // pred_check
    _
  $region19: #{reinforce_net3_forward.1} parent=0 // pred_check_branch
    %19 = sbr.rel (0) target = $region21
  $region20: #{reinforce_net3_forward.1} parent=0 // pred_region
    _
  $region21: #{reinforce_net3_forward.1} parent=0 // pred_fallthru
    _
  %v21 = vld [vmem:[%s0] sm:$0xff]
  %v22 = vld [vmem:[%s0 + $0x8] sm:$0xf]
  %v24 = vcombine.high %v21, %v21
  %v26 = vpack.c.bf16 %v21, %v21
  %v27 = vpack.c.bf16 %v24, %v24
  %v28 = vpack.c.bf16 %v22, %v22
  %v29 = vld [vmem:[%s1] sm:$0xff]
  %v30 = vld [vmem:[%s1 + $0x8] sm:$0xff]
  %v31 = vld [vmem:[%s1 + $0x10] sm:$0xff]
  %v32 = vld [vmem:[%s1 + $0x18] sm:$0xff]
  %v33 = vld [vmem:[%s1 + $0x20] sm:$0xff]
  %v34 = vld [vmem:[%s1 + $0x28] sm:$0xff]
  %v35 = vld [vmem:[%s1 + $0x30] sm:$0xff]
  %v36 = vld [vmem:[%s1 + $0x38] sm:$0xff]
  %v37 = vld [vmem:[%s1 + $0x40] sm:$0xff]
  %v38 = vld [vmem:[%s1 + $0x48] sm:$0xff]
  %v39 = vld [vmem:[%s1 + $0x50] sm:$0xff]
  %v40 = vld [vmem:[%s1 + $0x58] sm:$0xff]
  %v41 = vld [vmem:[%s1 + $0x60] sm:$0xff]
  %v42 = vld [vmem:[%s1 + $0x68] sm:$0xff]
  %v43 = vld [vmem:[%s1 + $0x70] sm:$0xff]
  %v44 = vld [vmem:[%s1 + $0x78] sm:$0xff]
  %v45 = vld [vmem:[%s1 + $0x80] sm:$0xff]
  %v46 = vld [vmem:[%s1 + $0x88] sm:$0xff]
  %v47 = vld [vmem:[%s1 + $0x90] sm:$0xff]
  %v48 = vld [vmem:[%s1 + $0x98] sm:$0xff]
  %v49 = vld [vmem:[%s1 + $0xa0] sm:$0xff]
  %v50 = vld [vmem:[%s1 + $0xa8] sm:$0xff]
  %v51 = vld [vmem:[%s1 + $0xb0] sm:$0xff]
  %v52 = vld [vmem:[%s1 + $0xb8] sm:$0xff]
  %v53 = vld [vmem:[%s1 + $0xc0] sm:$0xff]
  %v54 = vld [vmem:[%s1 + $0xc8] sm:$0xff]
  %v55 = vld [vmem:[%s1 + $0xd0] sm:$0xff]
  %v56 = vld [vmem:[%s1 + $0xd8] sm:$0xff]
  %v57 = vld [vmem:[%s1 + $0xe0] sm:$0xff]
  %v58 = vld [vmem:[%s1 + $0xe8] sm:$0xff]
  %v59 = vld [vmem:[%s1 + $0xf0] sm:$0xff]
  %v60 = vld [vmem:[%s1 + $0xf8] sm:$0xff]
  %v61 = vld [vmem:[%s1 + $0x100] sm:$0xff]
  %v62 = vld [vmem:[%s1 + $0x108] sm:$0xff]
  %v63 = vld [vmem:[%s1 + $0x110] sm:$0xff]
  %v64 = vld [vmem:[%s1 + $0x118] sm:$0xff]
  %v65 = vld [vmem:[%s1 + $0x120] sm:$0x33]
  %v66 = vld [vmem:[%s2] sm:$0x3]
  %v68 = vlaneseq
  %v69 = vshrl.u32 %v68, 7
  %v70 = vsub.s32 0, %v69
  %v71 = vrot.slane %v66, %v70
  %v72 = vlaneseq
  %v73 = vshrl.u32 %v72, 7
  %v74 = vsub.s32 1, %v73
  %v75 = vrot.slane %v66, %v74
  %v115 = vunpack.c.l.b16 %v29
  %v116 = vunpack.c.h.b16 %v29
  %v117 = vunpack.c.l.b16 %v30
  %v118 = vunpack.c.h.b16 %v30
  %v119 = vunpack.c.l.b16 %v31
  %v120 = vunpack.c.h.b16 %v31
  %v121 = vunpack.c.l.b16 %v32
  %v122 = vunpack.c.h.b16 %v32
  %v123 = vunpack.c.l.b16 %v33
  %v124 = vunpack.c.h.b16 %v33
  %v125 = vunpack.c.l.b16 %v34
  %v126 = vunpack.c.h.b16 %v34
  %v127 = vunpack.c.l.b16 %v35
  %v128 = vunpack.c.h.b16 %v35
  %v129 = vunpack.c.l.b16 %v36
  %v130 = vunpack.c.h.b16 %v36
  %v131 = vunpack.c.l.b16 %v37
  %v132 = vunpack.c.h.b16 %v37
  %v133 = vunpack.c.l.b16 %v38
  %v134 = vunpack.c.h.b16 %v38
  %v135 = vunpack.c.l.b16 %v39
  %v136 = vunpack.c.h.b16 %v39
  %v137 = vunpack.c.l.b16 %v40
  %v138 = vunpack.c.h.b16 %v40
  %v139 = vunpack.c.l.b16 %v41
  %v140 = vunpack.c.h.b16 %v41
  %v141 = vunpack.c.l.b16 %v42
  %v142 = vunpack.c.h.b16 %v42
  %v143 = vunpack.c.l.b16 %v43
  %v144 = vunpack.c.h.b16 %v43
  %v145 = vunpack.c.l.b16 %v44
  %v146 = vunpack.c.h.b16 %v44
  %v147 = vunpack.c.l.b16 %v45
  %v148 = vunpack.c.h.b16 %v45
  %v149 = vunpack.c.l.b16 %v46
  %v150 = vunpack.c.h.b16 %v46
  %v151 = vunpack.c.l.b16 %v47
  %v152 = vunpack.c.h.b16 %v47
  %v153 = vunpack.c.l.b16 %v48
  %v154 = vunpack.c.h.b16 %v48
  %v155 = vunpack.c.l.b16 %v49
  %v156 = vunpack.c.h.b16 %v49
  %v157 = vunpack.c.l.b16 %v50
  %v158 = vunpack.c.h.b16 %v50
  %v159 = vunpack.c.l.b16 %v51
  %v160 = vunpack.c.h.b16 %v51
  %v161 = vunpack.c.l.b16 %v52
  %v162 = vunpack.c.h.b16 %v52
  %v163 = vunpack.c.l.b16 %v53
  %v164 = vunpack.c.h.b16 %v53
  %v165 = vunpack.c.l.b16 %v54
  %v166 = vunpack.c.h.b16 %v54
  %v167 = vunpack.c.l.b16 %v55
  %v168 = vunpack.c.h.b16 %v55
  %v169 = vunpack.c.l.b16 %v56
  %v170 = vunpack.c.h.b16 %v56
  %v171 = vunpack.c.l.b16 %v57
  %v172 = vunpack.c.h.b16 %v57
  %v173 = vunpack.c.l.b16 %v58
  %v174 = vunpack.c.h.b16 %v58
  %v175 = vunpack.c.l.b16 %v59
  %v176 = vunpack.c.h.b16 %v59
  %v177 = vunpack.c.l.b16 %v60
  %v178 = vunpack.c.h.b16 %v60
  %v179 = vunpack.c.l.b16 %v61
  %v180 = vunpack.c.h.b16 %v61
  %v181 = vunpack.c.l.b16 %v62
  %v182 = vunpack.c.h.b16 %v62
  %v183 = vunpack.c.l.b16 %v63
  %v184 = vunpack.c.h.b16 %v63
  %v185 = vunpack.c.l.b16 %v64
  %v186 = vunpack.c.h.b16 %v64
  %v187 = vunpack.c.l.b16 %v65
  %v188 = vunpack.c.h.b16 %v65
  %v189 = vpack.c.b16 %v117, %v115
  %v190 = vpack.c.b16 %v118, %v116
  %v191 = vpack.c.b16 %v121, %v119
  %v192 = vpack.c.b16 %v122, %v120
  %v193 = vpack.c.b16 %v125, %v123
  %v194 = vpack.c.b16 %v126, %v124
  %v195 = vpack.c.b16 %v129, %v127
  %v196 = vpack.c.b16 %v130, %v128
  %v197 = vpack.c.b16 %v133, %v131
  %v198 = vpack.c.b16 %v134, %v132
  %v199 = vpack.c.b16 %v137, %v135
  %v200 = vpack.c.b16 %v138, %v136
  %v201 = vpack.c.b16 %v141, %v139
  %v202 = vpack.c.b16 %v142, %v140
  %v203 = vpack.c.b16 %v145, %v143
  %v204 = vpack.c.b16 %v146, %v144
  %v205 = vpack.c.b16 %v149, %v147
  %v206 = vpack.c.b16 %v150, %v148
  %v207 = vpack.c.b16 %v153, %v151
  %v208 = vpack.c.b16 %v154, %v152
  %v209 = vpack.c.b16 %v157, %v155
  %v210 = vpack.c.b16 %v158, %v156
  %v211 = vpack.c.b16 %v161, %v159
  %v212 = vpack.c.b16 %v162, %v160
  %v213 = vpack.c.b16 %v165, %v163
  %v214 = vpack.c.b16 %v166, %v164
  %v215 = vpack.c.b16 %v169, %v167
  %v216 = vpack.c.b16 %v170, %v168
  %v217 = vpack.c.b16 %v173, %v171
  %v218 = vpack.c.b16 %v174, %v172
  %v219 = vpack.c.b16 %v177, %v175
  %v220 = vpack.c.b16 %v178, %v176
  %v221 = vpack.c.b16 %v181, %v179
  %v222 = vpack.c.b16 %v182, %v180
  %v223 = vpack.c.b16 %v185, %v183
  %v224 = vpack.c.b16 %v186, %v184
  %v225 = vpack.c.b16 %v187, %v187
  %v226 = vpack.c.b16 %v188, %v188
  %vm263 = vcmask 285696
  %v265 = vsel %vm263, %v28, 0
  %vm267 = vcmask 1040384
  %vm268 = vcmask 1041408
  %v269 = vsel %vm267, 4294967295, 65535
  %v270 = vsel %vm268, %v269, 0
  %v272 = vand.u32 %v225, %v270
  %v275 = vand.u32 %v226, %v270
  %277 = vmatprep.subr.bf16.mxu0 %v190
  %278 = vmatpush1.bf16.msra.mxu0 %v189
  %279 = vmatprep.subr.bf16.mxu0 %v192
  %280 = vmatpush1.bf16.msra.mxu0 %v191
  %281 = vmatprep.subr.bf16.mxu0 %v194
  %282 = vmatpush1.bf16.msra.mxu0 %v193
  %283 = vmatprep.subr.bf16.mxu0 %v196
  %284 = vmatpush1.bf16.msra.mxu0 %v195
  %285 = vmatprep.subr.bf16.mxu0 %v198
  %286 = vmatpush1.bf16.msra.mxu0 %v197
  %287 = vmatprep.subr.bf16.mxu0 %v200
  %288 = vmatpush1.bf16.msra.mxu0 %v199
  %289 = vmatprep.subr.bf16.mxu0 %v202
  %290 = vmatpush1.bf16.msra.mxu0 %v201
  %291 = vmatprep.subr.bf16.mxu0 %v204
  %292 = vmatpush1.bf16.msra.mxu0 %v203
  %293 = vmatprep.subr.bf16.mxu0 %v206
  %294 = vmatpush1.bf16.msra.mxu0 %v205
  %295 = vmatprep.subr.bf16.mxu0 %v208
  %296 = vmatpush1.bf16.msra.mxu0 %v207
  %297 = vmatprep.subr.bf16.mxu0 %v210
  %298 = vmatpush1.bf16.msra.mxu0 %v209
  %299 = vmatprep.subr.bf16.mxu0 %v212
  %300 = vmatpush1.bf16.msra.mxu0 %v211
  %301 = vmatprep.subr.bf16.mxu0 %v214
  %302 = vmatpush1.bf16.msra.mxu0 %v213
  %303 = vmatprep.subr.bf16.mxu0 %v216
  %304 = vmatpush1.bf16.msra.mxu0 %v215
  %305 = vmatprep.subr.bf16.mxu0 %v218
  %306 = vmatpush1.bf16.msra.mxu0 %v217
  %307 = vmatprep.subr.bf16.mxu0 %v220
  %308 = vmatpush1.bf16.msra.mxu0 %v219
  %309 = vmatprep.mubr.bf16.mxu0 %v27
  %310 = vmatmul.mubr.bf16.gmra.mrb[0].mxu0 %v26
  %v311 = vpop.f32.mrb[0].mxu0
  %v312 = vadd.f32 %v71, %v311
  %v313 = vpop.f32.mrb[0].mxu0
  %v314 = vadd.f32 %v75, %v313
  %v315 = vpop.f32.mrb[0].mxu0
  %v316 = vpop.f32.mrb[0].mxu0
  %317 = vdwg.mxu0
  %318 = vmatprep.subr.bf16.mxu0 %v222
  %319 = vmatpush1.bf16.msra.mxu0 %v221
  %320 = vmatprep.subr.bf16.mxu0 %v224
  %321 = vmatpush1.bf16.msra.mxu0 %v223
  %322 = vmatprep.subr.bf16.mxu0 %v275
  %323 = vmatpush1.bf16.msra.mxu0 %v272
  %324 = vmatprep.subr.bf16.mxu0 0
  %325 = vmatpush1.bf16.msra.mxu0 0
  %326 = vmatprep.subr.bf16.mxu0 0
  %327 = vmatpush1.bf16.msra.mxu0 0
  %328 = vmatprep.subr.bf16.mxu0 0
  %329 = vmatpush1.bf16.msra.mxu0 0
  %330 = vmatprep.subr.bf16.mxu0 0
  %331 = vmatpush1.bf16.msra.mxu0 0
  %332 = vmatprep.subr.bf16.mxu0 0
  %333 = vmatpush1.bf16.msra.mxu0 0
  %334 = vmatprep.subr.bf16.mxu0 0
  %335 = vmatpush1.bf16.msra.mxu0 0
  %336 = vmatprep.subr.bf16.mxu0 0
  %337 = vmatpush1.bf16.msra.mxu0 0
  %338 = vmatprep.subr.bf16.mxu0 0
  %339 = vmatpush1.bf16.msra.mxu0 0
  %340 = vmatprep.subr.bf16.mxu0 0
  %341 = vmatpush1.bf16.msra.mxu0 0
  %342 = vmatprep.subr.bf16.mxu0 0
  %343 = vmatpush1.bf16.msra.mxu0 0
  %344 = vmatprep.subr.bf16.mxu0 0
  %345 = vmatpush1.bf16.msra.mxu0 0
  %346 = vmatprep.subr.bf16.mxu0 0
  %347 = vmatpush1.bf16.msra.mxu0 0
  %348 = vmatprep.subr.bf16.mxu0 0
  %349 = vmatpush1.bf16.msra.mxu0 0
  %350 = vmatprep.mubr.bf16.mxu0 0
  %351 = vmatmul.mubr.bf16.gmra.mrb[0].mxu0 %v265
  %v352 = vpop.f32.mrb[0].mxu0
  %v353 = vadd.f32 %v312, %v352
  %v354 = vpop.f32.mrb[0].mxu0
  %v355 = vadd.f32 %v314, %v354
  %v356 = vpop.f32.mrb[0].mxu0
  %v357 = vpop.f32.mrb[0].mxu0
  %358 = vdwg.mxu0
  %v359 = vmax.f32 %v353, 0.0
  %v360 = vmax.f32 %v355, 0.0
  %v361 = vpack.c.bf16 %v359, %v359
  %v362 = vpack.c.bf16 %v360, %v360
  %v363 = vld [vmem:[%s3] sm:$0xf]
  %v364 = vld [vmem:[%s3 + $0x4] sm:$0xf]
  %v365 = vld [vmem:[%s3 + $0x8] sm:$0xf]
  %v366 = vld [vmem:[%s3 + $0xc] sm:$0xf]
  %v367 = vld [vmem:[%s3 + $0x10] sm:$0xf]
  %v368 = vld [vmem:[%s3 + $0x14] sm:$0xf]
  %v369 = vld [vmem:[%s3 + $0x18] sm:$0xf]
  %v370 = vld [vmem:[%s3 + $0x1c] sm:$0xf]
  %v371 = vld [vmem:[%s3 + $0x20] sm:$0xf]
  %v372 = vld [vmem:[%s3 + $0x24] sm:$0xf]
  %v373 = vld [vmem:[%s3 + $0x28] sm:$0xf]
  %v374 = vld [vmem:[%s3 + $0x2c] sm:$0xf]
  %v375 = vld [vmem:[%s3 + $0x30] sm:$0xf]
  %v376 = vld [vmem:[%s3 + $0x34] sm:$0xf]
  %v377 = vld [vmem:[%s3 + $0x38] sm:$0xf]
  %v378 = vld [vmem:[%s3 + $0x3c] sm:$0xf]
  %v379 = vld [vmem:[%s3 + $0x40] sm:$0xf]
  %v380 = vld [vmem:[%s3 + $0x44] sm:$0xf]
  %v381 = vld [vmem:[%s3 + $0x48] sm:$0xf]
  %v382 = vld [vmem:[%s3 + $0x4c] sm:$0xf]
  %v383 = vld [vmem:[%s3 + $0x50] sm:$0xf]
  %v384 = vld [vmem:[%s3 + $0x54] sm:$0xf]
  %v385 = vld [vmem:[%s3 + $0x58] sm:$0xf]
  %v386 = vld [vmem:[%s3 + $0x5c] sm:$0xf]
  %v387 = vld [vmem:[%s3 + $0x60] sm:$0xf]
  %v388 = vld [vmem:[%s3 + $0x64] sm:$0xf]
  %v389 = vld [vmem:[%s3 + $0x68] sm:$0xf]
  %v390 = vld [vmem:[%s3 + $0x6c] sm:$0xf]
  %v391 = vld [vmem:[%s3 + $0x70] sm:$0xf]
  %v392 = vld [vmem:[%s3 + $0x74] sm:$0xf]
  %v393 = vld [vmem:[%s3 + $0x78] sm:$0xf]
  %v394 = vld [vmem:[%s3 + $0x7c] sm:$0xf]
  %v395 = vld [vmem:[%s4] sm:$0x1]
  %v397 = vlaneseq
  %v398 = vshrl.u32 %v397, 7
  %v399 = vsub.s32 0, %v398
  %v400 = vrot.slane %v395, %v399
  %v434 = vunpack.c.l.b16 %v363
  %v435 = vunpack.c.l.b16 %v364
  %v436 = vunpack.c.l.b16 %v365
  %v437 = vunpack.c.l.b16 %v366
  %v438 = vunpack.c.l.b16 %v367
  %v439 = vunpack.c.l.b16 %v368
  %v440 = vunpack.c.l.b16 %v369
  %v441 = vunpack.c.l.b16 %v370
  %v442 = vunpack.c.l.b16 %v371
  %v443 = vunpack.c.l.b16 %v372
  %v444 = vunpack.c.l.b16 %v373
  %v445 = vunpack.c.l.b16 %v374
  %v446 = vunpack.c.l.b16 %v375
  %v447 = vunpack.c.l.b16 %v376
  %v448 = vunpack.c.l.b16 %v377
  %v449 = vunpack.c.l.b16 %v378
  %v450 = vunpack.c.l.b16 %v379
  %v451 = vunpack.c.l.b16 %v380
  %v452 = vunpack.c.l.b16 %v381
  %v453 = vunpack.c.l.b16 %v382
  %v454 = vunpack.c.l.b16 %v383
  %v455 = vunpack.c.l.b16 %v384
  %v456 = vunpack.c.l.b16 %v385
  %v457 = vunpack.c.l.b16 %v386
  %v458 = vunpack.c.l.b16 %v387
  %v459 = vunpack.c.l.b16 %v388
  %v460 = vunpack.c.l.b16 %v389
  %v461 = vunpack.c.l.b16 %v390
  %v462 = vunpack.c.l.b16 %v391
  %v463 = vunpack.c.l.b16 %v392
  %v464 = vunpack.c.l.b16 %v393
  %v465 = vunpack.c.l.b16 %v394
  %v466 = vpack.c.b16 %v435, %v434
  %v467 = vpack.c.b16 %v437, %v436
  %v468 = vpack.c.b16 %v439, %v438
  %v469 = vpack.c.b16 %v441, %v440
  %v470 = vpack.c.b16 %v443, %v442
  %v471 = vpack.c.b16 %v445, %v444
  %v472 = vpack.c.b16 %v447, %v446
  %v473 = vpack.c.b16 %v449, %v448
  %v474 = vpack.c.b16 %v451, %v450
  %v475 = vpack.c.b16 %v453, %v452
  %v476 = vpack.c.b16 %v455, %v454
  %v477 = vpack.c.b16 %v457, %v456
  %v478 = vpack.c.b16 %v459, %v458
  %v479 = vpack.c.b16 %v461, %v460
  %v480 = vpack.c.b16 %v463, %v462
  %v481 = vpack.c.b16 %v465, %v464
  %498 = vmatprep.subr.bf16.mxu0 0
  %499 = vmatpush1.bf16.msra.mxu0 %v466
  %500 = vmatprep.subr.bf16.mxu0 0
  %501 = vmatpush1.bf16.msra.mxu0 %v467
  %502 = vmatprep.subr.bf16.mxu0 0
  %503 = vmatpush1.bf16.msra.mxu0 %v468
  %504 = vmatprep.subr.bf16.mxu0 0
  %505 = vmatpush1.bf16.msra.mxu0 %v469
  %506 = vmatprep.subr.bf16.mxu0 0
  %507 = vmatpush1.bf16.msra.mxu0 %v470
  %508 = vmatprep.subr.bf16.mxu0 0
  %509 = vmatpush1.bf16.msra.mxu0 %v471
  %510 = vmatprep.subr.bf16.mxu0 0
  %511 = vmatpush1.bf16.msra.mxu0 %v472
  %512 = vmatprep.subr.bf16.mxu0 0
  %513 = vmatpush1.bf16.msra.mxu0 %v473
  %514 = vmatprep.subr.bf16.mxu0 0
  %515 = vmatpush1.bf16.msra.mxu0 %v474
  %516 = vmatprep.subr.bf16.mxu0 0
  %517 = vmatpush1.bf16.msra.mxu0 %v475
  %518 = vmatprep.subr.bf16.mxu0 0
  %519 = vmatpush1.bf16.msra.mxu0 %v476
  %520 = vmatprep.subr.bf16.mxu0 0
  %521 = vmatpush1.bf16.msra.mxu0 %v477
  %522 = vmatprep.subr.bf16.mxu0 0
  %523 = vmatpush1.bf16.msra.mxu0 %v478
  %524 = vmatprep.subr.bf16.mxu0 0
  %525 = vmatpush1.bf16.msra.mxu0 %v479
  %526 = vmatprep.subr.bf16.mxu0 0
  %527 = vmatpush1.bf16.msra.mxu0 %v480
  %528 = vmatprep.subr.bf16.mxu0 0
  %529 = vmatpush1.bf16.msra.mxu0 %v481
  %530 = vmatprep.mubr.bf16.mxu0 %v362
  %531 = vmatmul.mubr.bf16.gmra.mrb[0].mxu0 %v361
  %v532 = vpop.f32.mrb[0].mxu0
  %v533 = vadd.f32 %v400, %v532
  %v534 = vpop.f32.mrb[0].mxu0
  %v535 = vpop.f32.mrb[0].mxu0
  %v536 = vpop.f32.mrb[0].mxu0
  %537 = vdwg.mxu0
  %vm538 = vcmask 1043456
  %v539 = vsel %vm538, %v533, -inf
  %540 = vmax.xlane.f32.xlu0 %v539
  %v541 = vpop.xlane.xlu0 %540
  %v542 = vsub.f32 %v533, %v541
  %v543 = vmul.f32 %v542, 1.442695
  %v544 = vpow.pop %v543
  %v545 = vsel %vm538, %v544, 0.0
  %546 = vadd.xlane.f32.xlu0 %v545
  %v547 = vpop.xlane.xlu0 %546
  %v548 = vrcp.pop %v547
  %v549 = vmul.f32 %v544, %v548
  %v550 = vpack.c.bf16 %v549, %v549
  %551 = vst [vmem:[%s5] sm:$0x3] %v550
  // Predicated region
  $region22: #{reinforce_net3_forward.1} parent=0 // pred_check
    _
  $region23: #{reinforce_net3_forward.1} parent=0 // pred_check_branch
    %553 = sbr.rel (0) target = $region25
  $region24: #{reinforce_net3_forward.1} parent=0 // pred_region
    _
  $region25: #{reinforce_net3_forward.1} parent=0 // pred_fallthru
    _
  // Predicated region
  $region26: #{reinforce_net3_forward.1} parent=0 // pred_check
    _
  $region27: #{reinforce_net3_forward.1} parent=0 // pred_check_branch
    %555 = sbr.rel (0) target = $region29
  $region28: #{reinforce_net3_forward.1} parent=0 // pred_region
    _
  $region29: #{reinforce_net3_forward.1} parent=0 // pred_fallthru
    _

</llo_original>
